<compile_context>
chip_gen: v7x
topology: tpu7x:2x2x1
jax: 0.10.0
libtpu: 0.0.40
codegen_flags: <defaults>
</compile_context>

<pallas_src>
import functools

import jax
import jax.numpy as jnp
from jax.experimental import pallas as pl
from jax.experimental.pallas import tpu as pltpu

LANE = 128


def mil_fused_kernel(x_ref,            # (B*M, C*H*W)  raw flattened instance images
                     wbe_ref, bb_ref,  # (C*H*W, IH), (1, IH)   GAP folded into backbone Linear
                     w1_ref, b1_ref,   # (IH, HID), (1, HID)    attention layer 1
                     w2_ref, b2_ref,   # (HID, 1), (1, 1)       attention layer 2
                     wc_ref, bc_ref,   # (IH, NCp), (1, NCp)    lane-padded MIL classifier
                     out_ref,          # (B, NCp)               lane-dense output slab
                     *, num_bags, bag_size):
    # Fused GAP + backbone Linear for ALL instances at once (MXU, f32 accum).
    feats = jnp.dot(x_ref[...], wbe_ref[...],
                    preferred_element_type=jnp.float32) + bb_ref[...]        # (BM, IH)

    # Attention MLP for all instances: Linear -> tanh -> Linear.
    h = jnp.tanh(jnp.dot(feats, w1_ref[...],
                         preferred_element_type=jnp.float32) + b1_ref[...])  # (BM, HID)
    logits = jnp.dot(h, w2_ref[...],
                     preferred_element_type=jnp.float32) + b2_ref[...]       # (BM, 1)

    # Per-bag softmax over instances + attention-weighted aggregation.
    # Static unroll over bags (num_bags is tiny); slices are sublane-aligned
    # since bag_size is a multiple of 8 here.
    aggs = []
    for b in range(num_bags):
        lo = b * bag_size
        hi = lo + bag_size
        l = logits[lo:hi, :]                                   # (M, 1)
        f = feats[lo:hi, :]                                    # (M, IH)
        mx = jnp.max(l, axis=0, keepdims=True)                 # stable softmax
        e = jnp.exp(l - mx)
        w = e / jnp.sum(e, axis=0, keepdims=True)              # (M, 1)
        aggs.append(jnp.sum(w * f, axis=0, keepdims=True))     # (1, IH)
    agg = jnp.concatenate(aggs, axis=0)                        # (B, IH)

    # MIL classifier, padded to 128 lanes -> single unmasked-lane store.
    cls = jnp.dot(agg, wc_ref[...],
                  preferred_element_type=jnp.float32) + bc_ref[...]          # (B, NCp)
    out_ref[...] = cls.astype(out_ref.dtype)


def simple_mil_forward(x, params):
    """x: (B, M, C, H, W) float32.  Returns (final_classification, final_classification)."""
    B, M, C, H, W = x.shape
    IH = params["wb"].shape[1]
    HID = params["w1"].shape[1]
    NC = params["wc"].shape[1]
    BM = B * M
    CHW = C * H * W
    NCp = max(LANE, pl.cdiv(NC, LANE) * LANE)                  # lane-dense output width

    # Flatten instances (contiguous reshape, no data movement).
    x_flat = x.reshape(BM, CHW)

    # Fold the global-average-pool into the backbone Linear weight.
    wb_eff = jnp.repeat(params["wb"], H * W, axis=0) / float(H * W)   # (CHW, IH)

    # Zero-pad the classifier to a 128-lane output slab; slice after the call.
    wc_p = jnp.pad(params["wc"], ((0, 0), (0, NCp - NC)))
    bc_p = jnp.pad(params["bc"], ((0, 0), (0, NCp - NC)))

    kernel = functools.partial(mil_fused_kernel, num_bags=B, bag_size=M)
    full2 = lambda i: (0, 0)   # every array is one full block; single grid step

    out_p = pl.pallas_call(
        kernel,
        out_shape=jax.ShapeDtypeStruct((B, NCp), jnp.float32),
        grid_spec=pl.GridSpec(
            grid=(1,),
            in_specs=[
                pl.BlockSpec((BM, CHW), full2),   # x_flat
                pl.BlockSpec((CHW, IH), full2),   # wb_eff (GAP folded in)
                pl.BlockSpec((1, IH), full2),     # bb
                pl.BlockSpec((IH, HID), full2),   # w1
                pl.BlockSpec((1, HID), full2),    # b1
                pl.BlockSpec((HID, 1), full2),    # w2
                pl.BlockSpec((1, 1), full2),      # b2
                pl.BlockSpec((IH, NCp), full2),   # wc (lane padded)
                pl.BlockSpec((1, NCp), full2),    # bc (lane padded)
            ],
            out_specs=pl.BlockSpec((B, NCp), full2),
        ),
        compiler_params=pltpu.CompilerParams(
            dimension_semantics=("arbitrary",)),
    )(x_flat, wb_eff, params["bb"], params["w1"], params["b1"],
      params["w2"], params["b2"], wc_p, bc_p)

    out = out_p[:, :NC]
    return out, out


def reference_forward(x, params):
    """Pure-JAX reference mirroring the PyTorch per-bag loop."""
    B, M = x.shape[0], x.shape[1]
    pooled = jnp.mean(x, axis=(-2, -1))                               # (B, M, C)
    feats = pooled @ params["wb"] + params["bb"]                      # (B, M, IH)
    outs = []
    for b in range(B):
        f = feats[b]                                                  # (M, IH)
        a = jnp.tanh(f @ params["w1"] + params["b1"]) @ params["w2"] + params["b2"]  # (M, 1)
        a = a.T                                                       # (1, M)
        w = jax.nn.softmax(a, axis=1)                                 # (1, M)
        agg = w @ f                                                   # (1, IH)
        outs.append(agg @ params["wc"] + params["bc"])                # (1, NC)
    return jnp.concatenate(outs, axis=0)


if __name__ == "__main__":
    # Small shapes consistent with the module's forward:
    B, M = 2, 8                 # batch of bags, instances per bag
    C, H, W = 4, 16, 16         # instance image NCHW
    IH, HID, NC = 32, 64, 2     # instance_hidden_size, hidden_size, num_classes

    key = jax.random.PRNGKey(0)
    ks = jax.random.split(key, 10)
    x = jax.random.normal(ks[0], (B, M, C, H, W), dtype=jnp.float32)

    params = {
        "wb": jax.random.normal(ks[1], (C, IH), jnp.float32) * 0.1,
        "bb": jax.random.normal(ks[2], (1, IH), jnp.float32) * 0.1,
        "w1": jax.random.normal(ks[3], (IH, HID), jnp.float32) * 0.1,
        "b1": jax.random.normal(ks[4], (1, HID), jnp.float32) * 0.1,
        "w2": jax.random.normal(ks[5], (HID, 1), jnp.float32) * 0.1,
        "b2": jax.random.normal(ks[6], (1, 1), jnp.float32) * 0.1,
        "wc": jax.random.normal(ks[7], (IH, NC), jnp.float32) * 0.1,
        "bc": jax.random.normal(ks[8], (1, NC), jnp.float32) * 0.1,
    }

    out, out2 = jax.jit(simple_mil_forward)(x, params)
    jax.block_until_ready(out)

    ref = reference_forward(x, params)
    assert out.shape == (B, NC)
    assert jnp.allclose(out, ref, atol=1e-4, rtol=1e-4), (out, ref)

    print("KERNEL_OK")
</pallas_src>

<mosaic_0001>
module attributes {stable_mosaic.version = 11 : i64} {
  func.func @mil_fused_kernel(%arg0: i32, %arg1: memref<16x1024xf32, #tpu.memory_space<vmem>>, %arg2: memref<1024x32xf32, #tpu.memory_space<vmem>>, %arg3: memref<1x32xf32, #tpu.memory_space<vmem>>, %arg4: memref<32x64xf32, #tpu.memory_space<vmem>>, %arg5: memref<1x64xf32, #tpu.memory_space<vmem>>, %arg6: memref<64x1xf32, #tpu.memory_space<vmem>>, %arg7: memref<1x1xf32, #tpu.memory_space<vmem>>, %arg8: memref<32x128xf32, #tpu.memory_space<vmem>>, %arg9: memref<1x128xf32, #tpu.memory_space<vmem>>, %arg10: memref<2x128xf32, #tpu.memory_space<vmem>>) attributes {dimension_semantics = [#tpu.dimension_semantics<arbitrary>], iteration_bounds = array<i64: 1>, scalar_prefetch = 0 : i64, scratch_operands = 0 : i64, tpu.core_type = #tpu.core_type<tc>, window_params = [{pipeline_mode = #tpu.pipeline_mode<synchronous>, transform_indices = @transform_0, window_bounds = array<i64: 16, 1024>}, {pipeline_mode = #tpu.pipeline_mode<synchronous>, transform_indices = @transform_1, window_bounds = array<i64: 1024, 32>}, {pipeline_mode = #tpu.pipeline_mode<synchronous>, transform_indices = @transform_2, window_bounds = array<i64: 1, 32>}, {pipeline_mode = #tpu.pipeline_mode<synchronous>, transform_indices = @transform_3, window_bounds = array<i64: 32, 64>}, {pipeline_mode = #tpu.pipeline_mode<synchronous>, transform_indices = @transform_4, window_bounds = array<i64: 1, 64>}, {pipeline_mode = #tpu.pipeline_mode<synchronous>, transform_indices = @transform_5, window_bounds = array<i64: 64, 1>}, {pipeline_mode = #tpu.pipeline_mode<synchronous>, transform_indices = @transform_6, window_bounds = array<i64: 1, 1>}, {pipeline_mode = #tpu.pipeline_mode<synchronous>, transform_indices = @transform_7, window_bounds = array<i64: 32, 128>}, {pipeline_mode = #tpu.pipeline_mode<synchronous>, transform_indices = @transform_8, window_bounds = array<i64: 1, 128>}, {pipeline_mode = #tpu.pipeline_mode<synchronous>, transform_indices = @transform_9, window_bounds = array<i64: 2, 128>}]} {
    %c0 = arith.constant 0 : index
    %c0_0 = arith.constant 0 : index
    %0 = vector.load %arg1[%c0, %c0_0] : memref<16x1024xf32, #tpu.memory_space<vmem>>, vector<16x1024xf32>
    %c0_1 = arith.constant 0 : index
    %c0_2 = arith.constant 0 : index
    %1 = vector.load %arg2[%c0_1, %c0_2] : memref<1024x32xf32, #tpu.memory_space<vmem>>, vector<1024x32xf32>
    %cst = arith.constant dense<0.000000e+00> : vector<16x32xf32>
    %2 = tpu.matmul %0, %1, %cst {dimension_numbers = #tpu.dot_dimension_numbers<[1], [0], [0], [1], [0, 0, 1, 1], [], []>} : vector<16x1024xf32>, vector<1024x32xf32>, vector<16x32xf32> -> vector<16x32xf32>
    %c0_3 = arith.constant 0 : index
    %c0_4 = arith.constant 0 : index
    %3 = vector.load %arg3[%c0_3, %c0_4] : memref<1x32xf32, #tpu.memory_space<vmem>>, vector<1x32xf32>
    %4 = vector.broadcast %3 : vector<1x32xf32> to vector<16x32xf32>
    %5 = arith.addf %2, %4 : vector<16x32xf32>
    %c0_5 = arith.constant 0 : index
    %c0_6 = arith.constant 0 : index
    %6 = vector.load %arg4[%c0_5, %c0_6] : memref<32x64xf32, #tpu.memory_space<vmem>>, vector<32x64xf32>
    %cst_7 = arith.constant dense<0.000000e+00> : vector<16x64xf32>
    %7 = tpu.matmul %5, %6, %cst_7 {dimension_numbers = #tpu.dot_dimension_numbers<[1], [0], [0], [1], [0, 0, 1, 1], [], []>} : vector<16x32xf32>, vector<32x64xf32>, vector<16x64xf32> -> vector<16x64xf32>
    %c0_8 = arith.constant 0 : index
    %c0_9 = arith.constant 0 : index
    %8 = vector.load %arg5[%c0_8, %c0_9] : memref<1x64xf32, #tpu.memory_space<vmem>>, vector<1x64xf32>
    %9 = vector.broadcast %8 : vector<1x64xf32> to vector<16x64xf32>
    %10 = arith.addf %7, %9 : vector<16x64xf32>
    %11 = math.tanh %10 : vector<16x64xf32>
    %c0_10 = arith.constant 0 : index
    %c0_11 = arith.constant 0 : index
    %12 = vector.load %arg6[%c0_10, %c0_11] : memref<64x1xf32, #tpu.memory_space<vmem>>, vector<64x1xf32>
    %cst_12 = arith.constant dense<0.000000e+00> : vector<16x1xf32>
    %13 = tpu.matmul %11, %12, %cst_12 {dimension_numbers = #tpu.dot_dimension_numbers<[1], [0], [0], [1], [0, 0, 1, 1], [], []>} : vector<16x64xf32>, vector<64x1xf32>, vector<16x1xf32> -> vector<16x1xf32>
    %c0_13 = arith.constant 0 : index
    %c0_14 = arith.constant 0 : index
    %14 = vector.load %arg7[%c0_13, %c0_14] : memref<1x1xf32, #tpu.memory_space<vmem>>, vector<1x1xf32>
    %15 = vector.broadcast %14 : vector<1x1xf32> to vector<16x1xf32>
    %16 = arith.addf %13, %15 : vector<16x1xf32>
    %17 = vector.extract_strided_slice %16 {offsets = [0, 0], sizes = [8, 1], strides = [1, 1]} : vector<16x1xf32> to vector<8x1xf32>
    %18 = vector.extract_strided_slice %5 {offsets = [0, 0], sizes = [8, 32], strides = [1, 1]} : vector<16x32xf32> to vector<8x32xf32>
    %cst_15 = arith.constant dense<0xFF800000> : vector<1xf32>
    %19 = vector.multi_reduction <maximumf>, %17, %cst_15 [0] : vector<8x1xf32> to vector<1xf32>
    %20 = vector.shape_cast %19 : vector<1xf32> to vector<1x1xf32>
    %21 = vector.broadcast %20 : vector<1x1xf32> to vector<8x1xf32>
    %22 = arith.subf %17, %21 : vector<8x1xf32>
    %23 = math.exp %22 : vector<8x1xf32>
    %cst_16 = arith.constant dense<0.000000e+00> : vector<1xf32>
    %24 = vector.multi_reduction <add>, %23, %cst_16 [0] : vector<8x1xf32> to vector<1xf32>
    %25 = vector.shape_cast %24 : vector<1xf32> to vector<1x1xf32>
    %26 = vector.broadcast %25 : vector<1x1xf32> to vector<8x1xf32>
    %27 = arith.divf %23, %26 : vector<8x1xf32>
    %28 = vector.broadcast %27 : vector<8x1xf32> to vector<8x32xf32>
    %29 = arith.mulf %28, %18 : vector<8x32xf32>
    %cst_17 = arith.constant dense<0.000000e+00> : vector<32xf32>
    %30 = vector.multi_reduction <add>, %29, %cst_17 [0] : vector<8x32xf32> to vector<32xf32>
    %31 = vector.shape_cast %30 : vector<32xf32> to vector<1x32xf32>
    %32 = vector.extract_strided_slice %16 {offsets = [8, 0], sizes = [8, 1], strides = [1, 1]} : vector<16x1xf32> to vector<8x1xf32>
    %33 = vector.extract_strided_slice %5 {offsets = [8, 0], sizes = [8, 32], strides = [1, 1]} : vector<16x32xf32> to vector<8x32xf32>
    %cst_18 = arith.constant dense<0xFF800000> : vector<1xf32>
    %34 = vector.multi_reduction <maximumf>, %32, %cst_18 [0] : vector<8x1xf32> to vector<1xf32>
    %35 = vector.shape_cast %34 : vector<1xf32> to vector<1x1xf32>
    %36 = vector.broadcast %35 : vector<1x1xf32> to vector<8x1xf32>
    %37 = arith.subf %32, %36 : vector<8x1xf32>
    %38 = math.exp %37 : vector<8x1xf32>
    %cst_19 = arith.constant dense<0.000000e+00> : vector<1xf32>
    %39 = vector.multi_reduction <add>, %38, %cst_19 [0] : vector<8x1xf32> to vector<1xf32>
    %40 = vector.shape_cast %39 : vector<1xf32> to vector<1x1xf32>
    %41 = vector.broadcast %40 : vector<1x1xf32> to vector<8x1xf32>
    %42 = arith.divf %38, %41 : vector<8x1xf32>
    %43 = vector.broadcast %42 : vector<8x1xf32> to vector<8x32xf32>
    %44 = arith.mulf %43, %33 : vector<8x32xf32>
    %cst_20 = arith.constant dense<0.000000e+00> : vector<32xf32>
    %45 = vector.multi_reduction <add>, %44, %cst_20 [0] : vector<8x32xf32> to vector<32xf32>
    %46 = vector.shape_cast %45 : vector<32xf32> to vector<1x32xf32>
    %47 = tpu.concatenate %31, %46 in 0 : vector<1x32xf32>, vector<1x32xf32> -> vector<2x32xf32>
    %c0_21 = arith.constant 0 : index
    %c0_22 = arith.constant 0 : index
    %48 = vector.load %arg8[%c0_21, %c0_22] : memref<32x128xf32, #tpu.memory_space<vmem>>, vector<32x128xf32>
    %cst_23 = arith.constant dense<0.000000e+00> : vector<2x128xf32>
    %49 = tpu.matmul %47, %48, %cst_23 {dimension_numbers = #tpu.dot_dimension_numbers<[1], [0], [0], [1], [0, 0, 1, 1], [], []>} : vector<2x32xf32>, vector<32x128xf32>, vector<2x128xf32> -> vector<2x128xf32>
    %c0_24 = arith.constant 0 : index
    %c0_25 = arith.constant 0 : index
    %50 = vector.load %arg9[%c0_24, %c0_25] : memref<1x128xf32, #tpu.memory_space<vmem>>, vector<1x128xf32>
    %51 = vector.broadcast %50 : vector<1x128xf32> to vector<2x128xf32>
    %52 = arith.addf %49, %51 : vector<2x128xf32>
    %c0_26 = arith.constant 0 : index
    %c0_27 = arith.constant 0 : index
    %53 = vector.load %arg10[%c0_26, %c0_27] : memref<2x128xf32, #tpu.memory_space<vmem>>, vector<2x128xf32>
    tpu.vector_store %arg10[%c0_26, %c0_27], %52 {strides = array<i32>} : memref<2x128xf32, #tpu.memory_space<vmem>>, vector<2x128xf32>,
    return
  }
  func.func @transform_0(%arg0: i32) -> (i32, i32) {
    %c0_i32 = arith.constant 0 : i32
    %c0_i32_0 = arith.constant 0 : i32
    %c0_i32_1 = arith.constant 0 : i32
    return %c0_i32, %c0_i32_0 : i32, i32
  }
  func.func @transform_1(%arg0: i32) -> (i32, i32) {
    %c0_i32 = arith.constant 0 : i32
    %c0_i32_0 = arith.constant 0 : i32
    %c0_i32_1 = arith.constant 0 : i32
    return %c0_i32, %c0_i32_0 : i32, i32
  }
  func.func @transform_2(%arg0: i32) -> (i32, i32) {
    %c0_i32 = arith.constant 0 : i32
    %c0_i32_0 = arith.constant 0 : i32
    %c0_i32_1 = arith.constant 0 : i32
    return %c0_i32, %c0_i32_0 : i32, i32
  }
  func.func @transform_3(%arg0: i32) -> (i32, i32) {
    %c0_i32 = arith.constant 0 : i32
    %c0_i32_0 = arith.constant 0 : i32
    %c0_i32_1 = arith.constant 0 : i32
    return %c0_i32, %c0_i32_0 : i32, i32
  }
  func.func @transform_4(%arg0: i32) -> (i32, i32) {
    %c0_i32 = arith.constant 0 : i32
    %c0_i32_0 = arith.constant 0 : i32
    %c0_i32_1 = arith.constant 0 : i32
    return %c0_i32, %c0_i32_0 : i32, i32
  }
  func.func @transform_5(%arg0: i32) -> (i32, i32) {
    %c0_i32 = arith.constant 0 : i32
    %c0_i32_0 = arith.constant 0 : i32
    %c0_i32_1 = arith.constant 0 : i32
    return %c0_i32, %c0_i32_0 : i32, i32
  }
  func.func @transform_6(%arg0: i32) -> (i32, i32) {
    %c0_i32 = arith.constant 0 : i32
    %c0_i32_0 = arith.constant 0 : i32
    %c0_i32_1 = arith.constant 0 : i32
    return %c0_i32, %c0_i32_0 : i32, i32
  }
  func.func @transform_7(%arg0: i32) -> (i32, i32) {
    %c0_i32 = arith.constant 0 : i32
    %c0_i32_0 = arith.constant 0 : i32
    %c0_i32_1 = arith.constant 0 : i32
    return %c0_i32, %c0_i32_0 : i32, i32
  }
  func.func @transform_8(%arg0: i32) -> (i32, i32) {
    %c0_i32 = arith.constant 0 : i32
    %c0_i32_0 = arith.constant 0 : i32
    %c0_i32_1 = arith.constant 0 : i32
    return %c0_i32, %c0_i32_0 : i32, i32
  }
  func.func @transform_9(%arg0: i32) -> (i32, i32) {
    %c0_i32 = arith.constant 0 : i32
    %c0_i32_0 = arith.constant 0 : i32
    %c0_i32_1 = arith.constant 0 : i32
    return %c0_i32, %c0_i32_0 : i32, i32
  }
}

</mosaic_0001>

<llo_original>
// kernel: simple_mil_forward.1
$region0: #{simple_mil_forward.1}
  #allocation0 [shape = 'u32[]', space=smem, size = 0x4, offset = 0x4, fixed_abs, tag = 'smem constant byte address 0x4 - core index']
  #allocation1 [shape = 'u32[144,128]{1,0:T(1,128)}', space=vmem, size = 0x12000, scoped, tag = 'internal scratch']
  #allocation2 [shape = 'f32[1,1]{1,0:T(1,128)S(1)}', space=vmem, size = 0x200, scoped, tag = 'scoped memory for simple_mil_forward.1']
  %s0 = inlined_call_operand.vmem [shape: f32[16,1024], index: 0, kind: input, shape index: {}]
  %s1 = inlined_call_operand.vmem [shape: f32[1024,32], index: 1, kind: input, shape index: {}]
  %s2 = inlined_call_operand.vmem [shape: f32[1,32], index: 2, kind: input, shape index: {}]
  %s3 = inlined_call_operand.vmem [shape: f32[32,64], index: 3, kind: input, shape index: {}]
  %s4 = inlined_call_operand.vmem [shape: f32[1,64], index: 4, kind: input, shape index: {}]
  %s5 = inlined_call_operand.vmem [shape: f32[64,1], index: 5, kind: input, shape index: {}]
  %s6 = inlined_call_operand.<no memory space> [shape: f32[1,1], index: 6, kind: input, shape index: {}]
  %s7 = inlined_call_operand.vmem [shape: f32[32,128], index: 7, kind: input, shape index: {}]
  %s8 = inlined_call_operand.vmem [shape: f32[1,128], index: 8, kind: input, shape index: {}]
  %s9 = inlined_call_operand.vmem [shape: f32[2,128], index: 9, kind: output, shape index: {}]
  %s10 = sld [smem:[#allocation0]]
  $region46: #{simple_mil_forward.1} parent=0
    _
  %s12 = ssub.s32 1, %s10
  %s13 = scalar_select 0, %s12, %s10
  %v14 = vstv %s6
  %15 = vst [vmem:[#allocation2] sm:$0x1] %v14
  // Predicated region
  $region2: #{simple_mil_forward.1} parent=0 // pred_check
    _
  $region3: #{simple_mil_forward.1} parent=0 // pred_check_branch
    %17 = sbr.rel (0) target = $region5
  $region4: #{simple_mil_forward.1} parent=0 // pred_region
    _
  $region5: #{simple_mil_forward.1} parent=0 // pred_fallthru
    _
  // Predicated region
  $region6: #{simple_mil_forward.1} parent=0 // pred_check
    _
  $region7: #{simple_mil_forward.1} parent=0 // pred_check_branch
    %19 = sbr.rel (0) target = $region9
  $region8: #{simple_mil_forward.1} parent=0 // pred_region
    _
  $region9: #{simple_mil_forward.1} parent=0 // pred_fallthru
    _
  // Predicated region
  $region10: #{simple_mil_forward.1} parent=0 // pred_check
    _
  $region11: #{simple_mil_forward.1} parent=0 // pred_check_branch
    %21 = sbr.rel (0) target = $region13
  $region12: #{simple_mil_forward.1} parent=0 // pred_region
    _
  $region13: #{simple_mil_forward.1} parent=0 // pred_fallthru
    _
  // Predicated region
  $region14: #{simple_mil_forward.1} parent=0 // pred_check
    _
  $region15: #{simple_mil_forward.1} parent=0 // pred_check_branch
    %23 = sbr.rel (0) target = $region17
  $region16: #{simple_mil_forward.1} parent=0 // pred_region
    _
  $region17: #{simple_mil_forward.1} parent=0 // pred_fallthru
    _
  // Predicated region
  $region18: #{simple_mil_forward.1} parent=0 // pred_check
    _
  $region19: #{simple_mil_forward.1} parent=0 // pred_check_branch
    %25 = sbr.rel (0) target = $region21
  $region20: #{simple_mil_forward.1} parent=0 // pred_region
    _
  $region21: #{simple_mil_forward.1} parent=0 // pred_fallthru
    _
  // Predicated region
  $region22: #{simple_mil_forward.1} parent=0 // pred_check
    _
  $region23: #{simple_mil_forward.1} parent=0 // pred_check_branch
    %27 = sbr.rel (0) target = $region25
  $region24: #{simple_mil_forward.1} parent=0 // pred_region
    _
  $region25: #{simple_mil_forward.1} parent=0 // pred_fallthru
    _
  // Predicated region
  $region26: #{simple_mil_forward.1} parent=0 // pred_check
    _
  $region27: #{simple_mil_forward.1} parent=0 // pred_check_branch
    %29 = sbr.rel (0) target = $region29
  $region28: #{simple_mil_forward.1} parent=0 // pred_region
    _
  $region29: #{simple_mil_forward.1} parent=0 // pred_fallthru
    _
  // Predicated region
  $region30: #{simple_mil_forward.1} parent=0 // pred_check
    _
  $region31: #{simple_mil_forward.1} parent=0 // pred_check_branch
    %31 = sbr.rel (0) target = $region33
  $region32: #{simple_mil_forward.1} parent=0 // pred_region
    _
  $region33: #{simple_mil_forward.1} parent=0 // pred_fallthru
    _
  // Predicated region
  $region34: #{simple_mil_forward.1} parent=0 // pred_check
    _
  $region35: #{simple_mil_forward.1} parent=0 // pred_check_branch
    %33 = sbr.rel (0) target = $region37
  $region36: #{simple_mil_forward.1} parent=0 // pred_region
    _
  $region37: #{simple_mil_forward.1} parent=0 // pred_fallthru
    _
  %v34 = vld [vmem:[%s0] sm:$0xff]
  %v35 = vld [vmem:[%s0 + $0x8] sm:$0xff]
  %v36 = vld [vmem:[%s0 + $0x10] sm:$0xff]
  %v37 = vld [vmem:[%s0 + $0x18] sm:$0xff]
  %v38 = vld [vmem:[%s0 + $0x20] sm:$0xff]
  %v39 = vld [vmem:[%s0 + $0x28] sm:$0xff]
  %v40 = vld [vmem:[%s0 + $0x30] sm:$0xff]
  %v41 = vld [vmem:[%s0 + $0x38] sm:$0xff]
  %v42 = vld [vmem:[%s0 + $0x40] sm:$0xff]
  %v43 = vld [vmem:[%s0 + $0x48] sm:$0xff]
  %v44 = vld [vmem:[%s0 + $0x50] sm:$0xff]
  %v45 = vld [vmem:[%s0 + $0x58] sm:$0xff]
  %v46 = vld [vmem:[%s0 + $0x60] sm:$0xff]
  %v47 = vld [vmem:[%s0 + $0x68] sm:$0xff]
  %v48 = vld [vmem:[%s0 + $0x70] sm:$0xff]
  %v49 = vld [vmem:[%s0 + $0x78] sm:$0xff]
  %v50 = vld [vmem:[%s1] sm:$0xff]
  %v51 = vld [vmem:[%s1 + $0x8] sm:$0xff]
  %v52 = vld [vmem:[%s1 + $0x10] sm:$0xff]
  %v53 = vld [vmem:[%s1 + $0x18] sm:$0xff]
  %v54 = vld [vmem:[%s1 + $0x20] sm:$0xff]
  %v55 = vld [vmem:[%s1 + $0x28] sm:$0xff]
  %v56 = vld [vmem:[%s1 + $0x30] sm:$0xff]
  %v57 = vld [vmem:[%s1 + $0x38] sm:$0xff]
  %v58 = vld [vmem:[%s1 + $0x40] sm:$0xff]
  %v59 = vld [vmem:[%s1 + $0x48] sm:$0xff]
  %v60 = vld [vmem:[%s1 + $0x50] sm:$0xff]
  %v61 = vld [vmem:[%s1 + $0x58] sm:$0xff]
  %v62 = vld [vmem:[%s1 + $0x60] sm:$0xff]
  %v63 = vld [vmem:[%s1 + $0x68] sm:$0xff]
  %v64 = vld [vmem:[%s1 + $0x70] sm:$0xff]
  %v65 = vld [vmem:[%s1 + $0x78] sm:$0xff]
  %v66 = vld [vmem:[%s1 + $0x80] sm:$0xff]
  %v67 = vld [vmem:[%s1 + $0x88] sm:$0xff]
  %v68 = vld [vmem:[%s1 + $0x90] sm:$0xff]
  %v69 = vld [vmem:[%s1 + $0x98] sm:$0xff]
  %v70 = vld [vmem:[%s1 + $0xa0] sm:$0xff]
  %v71 = vld [vmem:[%s1 + $0xa8] sm:$0xff]
  %v72 = vld [vmem:[%s1 + $0xb0] sm:$0xff]
  %v73 = vld [vmem:[%s1 + $0xb8] sm:$0xff]
  %v74 = vld [vmem:[%s1 + $0xc0] sm:$0xff]
  %v75 = vld [vmem:[%s1 + $0xc8] sm:$0xff]
  %v76 = vld [vmem:[%s1 + $0xd0] sm:$0xff]
  %v77 = vld [vmem:[%s1 + $0xd8] sm:$0xff]
  %v78 = vld [vmem:[%s1 + $0xe0] sm:$0xff]
  %v79 = vld [vmem:[%s1 + $0xe8] sm:$0xff]
  %v80 = vld [vmem:[%s1 + $0xf0] sm:$0xff]
  %v81 = vld [vmem:[%s1 + $0xf8] sm:$0xff]
  %v82 = vld [vmem:[%s1 + $0x100] sm:$0xff]
  %v83 = vld [vmem:[%s1 + $0x108] sm:$0xff]
  %v84 = vld [vmem:[%s1 + $0x110] sm:$0xff]
  %v85 = vld [vmem:[%s1 + $0x118] sm:$0xff]
  %v86 = vld [vmem:[%s1 + $0x120] sm:$0xff]
  %v87 = vld [vmem:[%s1 + $0x128] sm:$0xff]
  %v88 = vld [vmem:[%s1 + $0x130] sm:$0xff]
  %v89 = vld [vmem:[%s1 + $0x138] sm:$0xff]
  %v90 = vld [vmem:[%s1 + $0x140] sm:$0xff]
  %v91 = vld [vmem:[%s1 + $0x148] sm:$0xff]
  %v92 = vld [vmem:[%s1 + $0x150] sm:$0xff]
  %v93 = vld [vmem:[%s1 + $0x158] sm:$0xff]
  %v94 = vld [vmem:[%s1 + $0x160] sm:$0xff]
  %v95 = vld [vmem:[%s1 + $0x168] sm:$0xff]
  %v96 = vld [vmem:[%s1 + $0x170] sm:$0xff]
  %v97 = vld [vmem:[%s1 + $0x178] sm:$0xff]
  %v98 = vld [vmem:[%s1 + $0x180] sm:$0xff]
  %v99 = vld [vmem:[%s1 + $0x188] sm:$0xff]
  %v100 = vld [vmem:[%s1 + $0x190] sm:$0xff]
  %v101 = vld [vmem:[%s1 + $0x198] sm:$0xff]
  %v102 = vld [vmem:[%s1 + $0x1a0] sm:$0xff]
  %v103 = vld [vmem:[%s1 + $0x1a8] sm:$0xff]
  %v104 = vld [vmem:[%s1 + $0x1b0] sm:$0xff]
  %v105 = vld [vmem:[%s1 + $0x1b8] sm:$0xff]
  %v106 = vld [vmem:[%s1 + $0x1c0] sm:$0xff]
  %v107 = vld [vmem:[%s1 + $0x1c8] sm:$0xff]
  %v108 = vld [vmem:[%s1 + $0x1d0] sm:$0xff]
  %v109 = vld [vmem:[%s1 + $0x1d8] sm:$0xff]
  %v110 = vld [vmem:[%s1 + $0x1e0] sm:$0xff]
  %v111 = vld [vmem:[%s1 + $0x1e8] sm:$0xff]
  %v112 = vld [vmem:[%s1 + $0x1f0] sm:$0xff]
  %v113 = vld [vmem:[%s1 + $0x1f8] sm:$0xff]
  %v114 = vld [vmem:[%s1 + $0x200] sm:$0xff]
  %v115 = vld [vmem:[%s1 + $0x208] sm:$0xff]
  %v116 = vld [vmem:[%s1 + $0x210] sm:$0xff]
  %v117 = vld [vmem:[%s1 + $0x218] sm:$0xff]
  %v118 = vld [vmem:[%s1 + $0x220] sm:$0xff]
  %v119 = vld [vmem:[%s1 + $0x228] sm:$0xff]
  %v120 = vld [vmem:[%s1 + $0x230] sm:$0xff]
  %v121 = vld [vmem:[%s1 + $0x238] sm:$0xff]
  %v122 = vld [vmem:[%s1 + $0x240] sm:$0xff]
  %v123 = vld [vmem:[%s1 + $0x248] sm:$0xff]
  %v124 = vld [vmem:[%s1 + $0x250] sm:$0xff]
  %v125 = vld [vmem:[%s1 + $0x258] sm:$0xff]
  %v126 = vld [vmem:[%s1 + $0x260] sm:$0xff]
  %v127 = vld [vmem:[%s1 + $0x268] sm:$0xff]
  %v128 = vld [vmem:[%s1 + $0x270] sm:$0xff]
  %v129 = vld [vmem:[%s1 + $0x278] sm:$0xff]
  %v130 = vld [vmem:[%s1 + $0x280] sm:$0xff]
  %v131 = vld [vmem:[%s1 + $0x288] sm:$0xff]
  %v132 = vld [vmem:[%s1 + $0x290] sm:$0xff]
  %v133 = vld [vmem:[%s1 + $0x298] sm:$0xff]
  %v134 = vld [vmem:[%s1 + $0x2a0] sm:$0xff]
  %v135 = vld [vmem:[%s1 + $0x2a8] sm:$0xff]
  %v136 = vld [vmem:[%s1 + $0x2b0] sm:$0xff]
  %v137 = vld [vmem:[%s1 + $0x2b8] sm:$0xff]
  %v138 = vld [vmem:[%s1 + $0x2c0] sm:$0xff]
  %v139 = vld [vmem:[%s1 + $0x2c8] sm:$0xff]
  %v140 = vld [vmem:[%s1 + $0x2d0] sm:$0xff]
  %v141 = vld [vmem:[%s1 + $0x2d8] sm:$0xff]
  %v142 = vld [vmem:[%s1 + $0x2e0] sm:$0xff]
  %v143 = vld [vmem:[%s1 + $0x2e8] sm:$0xff]
  %v144 = vld [vmem:[%s1 + $0x2f0] sm:$0xff]
  %v145 = vld [vmem:[%s1 + $0x2f8] sm:$0xff]
  %v146 = vld [vmem:[%s1 + $0x300] sm:$0xff]
  %v147 = vld [vmem:[%s1 + $0x308] sm:$0xff]
  %v148 = vld [vmem:[%s1 + $0x310] sm:$0xff]
  %v149 = vld [vmem:[%s1 + $0x318] sm:$0xff]
  %v150 = vld [vmem:[%s1 + $0x320] sm:$0xff]
  %v151 = vld [vmem:[%s1 + $0x328] sm:$0xff]
  %v152 = vld [vmem:[%s1 + $0x330] sm:$0xff]
  %v153 = vld [vmem:[%s1 + $0x338] sm:$0xff]
  %v154 = vld [vmem:[%s1 + $0x340] sm:$0xff]
  %v155 = vld [vmem:[%s1 + $0x348] sm:$0xff]
  %v156 = vld [vmem:[%s1 + $0x350] sm:$0xff]
  %v157 = vld [vmem:[%s1 + $0x358] sm:$0xff]
  %v158 = vld [vmem:[%s1 + $0x360] sm:$0xff]
  %v159 = vld [vmem:[%s1 + $0x368] sm:$0xff]
  %v160 = vld [vmem:[%s1 + $0x370] sm:$0xff]
  %v161 = vld [vmem:[%s1 + $0x378] sm:$0xff]
  %v162 = vld [vmem:[%s1 + $0x380] sm:$0xff]
  %v163 = vld [vmem:[%s1 + $0x388] sm:$0xff]
  %v164 = vld [vmem:[%s1 + $0x390] sm:$0xff]
  %v165 = vld [vmem:[%s1 + $0x398] sm:$0xff]
  %v166 = vld [vmem:[%s1 + $0x3a0] sm:$0xff]
  %v167 = vld [vmem:[%s1 + $0x3a8] sm:$0xff]
  %v168 = vld [vmem:[%s1 + $0x3b0] sm:$0xff]
  %v169 = vld [vmem:[%s1 + $0x3b8] sm:$0xff]
  %v170 = vld [vmem:[%s1 + $0x3c0] sm:$0xff]
  %v171 = vld [vmem:[%s1 + $0x3c8] sm:$0xff]
  %v172 = vld [vmem:[%s1 + $0x3d0] sm:$0xff]
  %v173 = vld [vmem:[%s1 + $0x3d8] sm:$0xff]
  %v174 = vld [vmem:[%s1 + $0x3e0] sm:$0xff]
  %v175 = vld [vmem:[%s1 + $0x3e8] sm:$0xff]
  %v176 = vld [vmem:[%s1 + $0x3f0] sm:$0xff]
  %v177 = vld [vmem:[%s1 + $0x3f8] sm:$0xff]
  %v178 = vld [vmem:[%s2] sm:$0x1]
  %v180 = vlaneseq
  %v181 = vshrl.u32 %v180, 7
  %v182 = vsub.s32 0, %v181
  %v183 = vrot.slane %v178, %v182
  %185 = vmatprep.subr.mxu0 0.0
  %186 = vmatpush1.msra.mxu0 %v50
  %187 = vmatprep.subr.mxu0 0.0
  %188 = vmatpush1.msra.mxu0 %v51
  %189 = vmatprep.subr.mxu0 0.0
  %190 = vmatpush1.msra.mxu0 %v52
  %191 = vmatprep.subr.mxu0 0.0
  %192 = vmatpush1.msra.mxu0 %v53
  %193 = vmatprep.subr.mxu0 0.0
  %194 = vmatpush1.msra.mxu0 %v54
  %195 = vmatprep.subr.mxu0 0.0
  %196 = vmatpush1.msra.mxu0 %v55
  %197 = vmatprep.subr.mxu0 0.0
  %198 = vmatpush1.msra.mxu0 %v56
  %199 = vmatprep.subr.mxu0 0.0
  %200 = vmatpush1.msra.mxu0 %v57
  %201 = vmatprep.subr.mxu0 0.0
  %202 = vmatpush1.msra.mxu0 %v58
  %203 = vmatprep.subr.mxu0 0.0
  %204 = vmatpush1.msra.mxu0 %v59
  %205 = vmatprep.subr.mxu0 0.0
  %206 = vmatpush1.msra.mxu0 %v60
  %207 = vmatprep.subr.mxu0 0.0
  %208 = vmatpush1.msra.mxu0 %v61
  %209 = vmatprep.subr.mxu0 0.0
  %210 = vmatpush1.msra.mxu0 %v62
  %211 = vmatprep.subr.mxu0 0.0
  %212 = vmatpush1.msra.mxu0 %v63
  %213 = vmatprep.subr.mxu0 0.0
  %214 = vmatpush1.msra.mxu0 %v64
  %215 = vmatprep.subr.mxu0 0.0
  %216 = vmatpush1.msra.mxu0 %v65
  %217 = vmatprep.subr.mxu0 0.0
  %218 = vmatpush1.msra.mxu0 %v66
  %219 = vmatprep.subr.mxu0 0.0
  %220 = vmatpush1.msra.mxu0 %v67
  %221 = vmatprep.subr.mxu0 0.0
  %222 = vmatpush1.msra.mxu0 %v68
  %223 = vmatprep.subr.mxu0 0.0
  %224 = vmatpush1.msra.mxu0 %v69
  %225 = vmatprep.subr.mxu0 0.0
  %226 = vmatpush1.msra.mxu0 %v70
  %227 = vmatprep.subr.mxu0 0.0
  %228 = vmatpush1.msra.mxu0 %v71
  %229 = vmatprep.subr.mxu0 0.0
  %230 = vmatpush1.msra.mxu0 %v72
  %231 = vmatprep.subr.mxu0 0.0
  %232 = vmatpush1.msra.mxu0 %v73
  %233 = vmatprep.subr.mxu0 0.0
  %234 = vmatpush1.msra.mxu0 %v74
  %235 = vmatprep.subr.mxu0 0.0
  %236 = vmatpush1.msra.mxu0 %v75
  %237 = vmatprep.subr.mxu0 0.0
  %238 = vmatpush1.msra.mxu0 %v76
  %239 = vmatprep.subr.mxu0 0.0
  %240 = vmatpush1.msra.mxu0 %v77
  %241 = vmatprep.subr.mxu0 0.0
  %242 = vmatpush1.msra.mxu0 %v78
  %243 = vmatprep.subr.mxu0 0.0
  %244 = vmatpush1.msra.mxu0 %v79
  %245 = vmatprep.subr.mxu0 0.0
  %246 = vmatpush1.msra.mxu0 %v80
  %247 = vmatprep.subr.mxu0 0.0
  %248 = vmatpush1.msra.mxu0 %v81
  %249 = vmatprep.mubr.f32.mxu0 %v35
  %250 = vmatmul.mubr.f32.gmra.mrb[0].mxu0 %v34
  %v251 = vpop.f32.mrb[0].mxu0
  %v252 = vadd.f32 %v183, %v251
  %v253 = vpop.f32.mrb[0].mxu0
  %254 = vmatprep.mubr.f32.mxu0 %v43
  %255 = vmatmul.mubr.f32.gmra.mrb[0].mxu0 %v42
  %v256 = vpop.f32.mrb[0].mxu0
  %v257 = vadd.f32 %v183, %v256
  %v258 = vpop.f32.mrb[0].mxu0
  %259 = vdwg.mxu0
  %260 = vmatprep.subr.mxu0 0.0
  %261 = vmatpush1.msra.mxu0 %v82
  %262 = vmatprep.subr.mxu0 0.0
  %263 = vmatpush1.msra.mxu0 %v83
  %264 = vmatprep.subr.mxu0 0.0
  %265 = vmatpush1.msra.mxu0 %v84
  %266 = vmatprep.subr.mxu0 0.0
  %267 = vmatpush1.msra.mxu0 %v85
  %268 = vmatprep.subr.mxu0 0.0
  %269 = vmatpush1.msra.mxu0 %v86
  %270 = vmatprep.subr.mxu0 0.0
  %271 = vmatpush1.msra.mxu0 %v87
  %272 = vmatprep.subr.mxu0 0.0
  %273 = vmatpush1.msra.mxu0 %v88
  %274 = vmatprep.subr.mxu0 0.0
  %275 = vmatpush1.msra.mxu0 %v89
  %276 = vmatprep.subr.mxu0 0.0
  %277 = vmatpush1.msra.mxu0 %v90
  %278 = vmatprep.subr.mxu0 0.0
  %279 = vmatpush1.msra.mxu0 %v91
  %280 = vmatprep.subr.mxu0 0.0
  %281 = vmatpush1.msra.mxu0 %v92
  %282 = vmatprep.subr.mxu0 0.0
  %283 = vmatpush1.msra.mxu0 %v93
  %284 = vmatprep.subr.mxu0 0.0
  %285 = vmatpush1.msra.mxu0 %v94
  %286 = vmatprep.subr.mxu0 0.0
  %287 = vmatpush1.msra.mxu0 %v95
  %288 = vmatprep.subr.mxu0 0.0
  %289 = vmatpush1.msra.mxu0 %v96
  %290 = vmatprep.subr.mxu0 0.0
  %291 = vmatpush1.msra.mxu0 %v97
  %292 = vmatprep.subr.mxu0 0.0
  %293 = vmatpush1.msra.mxu0 %v98
  %294 = vmatprep.subr.mxu0 0.0
  %295 = vmatpush1.msra.mxu0 %v99
  %296 = vmatprep.subr.mxu0 0.0
  %297 = vmatpush1.msra.mxu0 %v100
  %298 = vmatprep.subr.mxu0 0.0
  %299 = vmatpush1.msra.mxu0 %v101
  %300 = vmatprep.subr.mxu0 0.0
  %301 = vmatpush1.msra.mxu0 %v102
  %302 = vmatprep.subr.mxu0 0.0
  %303 = vmatpush1.msra.mxu0 %v103
  %304 = vmatprep.subr.mxu0 0.0
  %305 = vmatpush1.msra.mxu0 %v104
  %306 = vmatprep.subr.mxu0 0.0
  %307 = vmatpush1.msra.mxu0 %v105
  %308 = vmatprep.subr.mxu0 0.0
  %309 = vmatpush1.msra.mxu0 %v106
  %310 = vmatprep.subr.mxu0 0.0
  %311 = vmatpush1.msra.mxu0 %v107
  %312 = vmatprep.subr.mxu0 0.0
  %313 = vmatpush1.msra.mxu0 %v108
  %314 = vmatprep.subr.mxu0 0.0
  %315 = vmatpush1.msra.mxu0 %v109
  %316 = vmatprep.subr.mxu0 0.0
  %317 = vmatpush1.msra.mxu0 %v110
  %318 = vmatprep.subr.mxu0 0.0
  %319 = vmatpush1.msra.mxu0 %v111
  %320 = vmatprep.subr.mxu0 0.0
  %321 = vmatpush1.msra.mxu0 %v112
  %322 = vmatprep.subr.mxu0 0.0
  %323 = vmatpush1.msra.mxu0 %v113
  %324 = vmatprep.mubr.f32.mxu0 %v37
  %325 = vmatmul.mubr.f32.gmra.mrb[0].mxu0 %v36
  %v326 = vpop.f32.mrb[0].mxu0
  %v327 = vadd.f32 %v252, %v326
  %v328 = vpop.f32.mrb[0].mxu0
  %329 = vmatprep.mubr.f32.mxu0 %v45
  %330 = vmatmul.mubr.f32.gmra.mrb[0].mxu0 %v44
  %v331 = vpop.f32.mrb[0].mxu0
  %v332 = vadd.f32 %v257, %v331
  %v333 = vpop.f32.mrb[0].mxu0
  %334 = vdwg.mxu0
  %335 = vmatprep.subr.mxu0 0.0
  %336 = vmatpush1.msra.mxu0 %v114
  %337 = vmatprep.subr.mxu0 0.0
  %338 = vmatpush1.msra.mxu0 %v115
  %339 = vmatprep.subr.mxu0 0.0
  %340 = vmatpush1.msra.mxu0 %v116
  %341 = vmatprep.subr.mxu0 0.0
  %342 = vmatpush1.msra.mxu0 %v117
  %343 = vmatprep.subr.mxu0 0.0
  %344 = vmatpush1.msra.mxu0 %v118
  %345 = vmatprep.subr.mxu0 0.0
  %346 = vmatpush1.msra.mxu0 %v119
  %347 = vmatprep.subr.mxu0 0.0
  %348 = vmatpush1.msra.mxu0 %v120
  %349 = vmatprep.subr.mxu0 0.0
  %350 = vmatpush1.msra.mxu0 %v121
  %351 = vmatprep.subr.mxu0 0.0
  %352 = vmatpush1.msra.mxu0 %v122
  %353 = vmatprep.subr.mxu0 0.0
  %354 = vmatpush1.msra.mxu0 %v123
  %355 = vmatprep.subr.mxu0 0.0
  %356 = vmatpush1.msra.mxu0 %v124
  %357 = vmatprep.subr.mxu0 0.0
  %358 = vmatpush1.msra.mxu0 %v125
  %359 = vmatprep.subr.mxu0 0.0
  %360 = vmatpush1.msra.mxu0 %v126
  %361 = vmatprep.subr.mxu0 0.0
  %362 = vmatpush1.msra.mxu0 %v127
  %363 = vmatprep.subr.mxu0 0.0
  %364 = vmatpush1.msra.mxu0 %v128
  %365 = vmatprep.subr.mxu0 0.0
  %366 = vmatpush1.msra.mxu0 %v129
  %367 = vmatprep.subr.mxu0 0.0
  %368 = vmatpush1.msra.mxu0 %v130
  %369 = vmatprep.subr.mxu0 0.0
  %370 = vmatpush1.msra.mxu0 %v131
  %371 = vmatprep.subr.mxu0 0.0
  %372 = vmatpush1.msra.mxu0 %v132
  %373 = vmatprep.subr.mxu0 0.0
  %374 = vmatpush1.msra.mxu0 %v133
  %375 = vmatprep.subr.mxu0 0.0
  %376 = vmatpush1.msra.mxu0 %v134
  %377 = vmatprep.subr.mxu0 0.0
  %378 = vmatpush1.msra.mxu0 %v135
  %379 = vmatprep.subr.mxu0 0.0
  %380 = vmatpush1.msra.mxu0 %v136
  %381 = vmatprep.subr.mxu0 0.0
  %382 = vmatpush1.msra.mxu0 %v137
  %383 = vmatprep.subr.mxu0 0.0
  %384 = vmatpush1.msra.mxu0 %v138
  %385 = vmatprep.subr.mxu0 0.0
  %386 = vmatpush1.msra.mxu0 %v139
  %387 = vmatprep.subr.mxu0 0.0
  %388 = vmatpush1.msra.mxu0 %v140
  %389 = vmatprep.subr.mxu0 0.0
  %390 = vmatpush1.msra.mxu0 %v141
  %391 = vmatprep.subr.mxu0 0.0
  %392 = vmatpush1.msra.mxu0 %v142
  %393 = vmatprep.subr.mxu0 0.0
  %394 = vmatpush1.msra.mxu0 %v143
  %395 = vmatprep.subr.mxu0 0.0
  %396 = vmatpush1.msra.mxu0 %v144
  %397 = vmatprep.subr.mxu0 0.0
  %398 = vmatpush1.msra.mxu0 %v145
  %399 = vmatprep.mubr.f32.mxu0 %v39
  %400 = vmatmul.mubr.f32.gmra.mrb[0].mxu0 %v38
  %v401 = vpop.f32.mrb[0].mxu0
  %v402 = vadd.f32 %v327, %v401
  %v403 = vpop.f32.mrb[0].mxu0
  %404 = vmatprep.mubr.f32.mxu0 %v47
  %405 = vmatmul.mubr.f32.gmra.mrb[0].mxu0 %v46
  %v406 = vpop.f32.mrb[0].mxu0
  %v407 = vadd.f32 %v332, %v406
  %v408 = vpop.f32.mrb[0].mxu0
  %409 = vdwg.mxu0
  %410 = vmatprep.subr.mxu0 0.0
  %411 = vmatpush1.msra.mxu0 %v146
  %412 = vmatprep.subr.mxu0 0.0
  %413 = vmatpush1.msra.mxu0 %v147
  %414 = vmatprep.subr.mxu0 0.0
  %415 = vmatpush1.msra.mxu0 %v148
  %416 = vmatprep.subr.mxu0 0.0
  %417 = vmatpush1.msra.mxu0 %v149
  %418 = vmatprep.subr.mxu0 0.0
  %419 = vmatpush1.msra.mxu0 %v150
  %420 = vmatprep.subr.mxu0 0.0
  %421 = vmatpush1.msra.mxu0 %v151
  %422 = vmatprep.subr.mxu0 0.0
  %423 = vmatpush1.msra.mxu0 %v152
  %424 = vmatprep.subr.mxu0 0.0
  %425 = vmatpush1.msra.mxu0 %v153
  %426 = vmatprep.subr.mxu0 0.0
  %427 = vmatpush1.msra.mxu0 %v154
  %428 = vmatprep.subr.mxu0 0.0
  %429 = vmatpush1.msra.mxu0 %v155
  %430 = vmatprep.subr.mxu0 0.0
  %431 = vmatpush1.msra.mxu0 %v156
  %432 = vmatprep.subr.mxu0 0.0
  %433 = vmatpush1.msra.mxu0 %v157
  %434 = vmatprep.subr.mxu0 0.0
  %435 = vmatpush1.msra.mxu0 %v158
  %436 = vmatprep.subr.mxu0 0.0
  %437 = vmatpush1.msra.mxu0 %v159
  %438 = vmatprep.subr.mxu0 0.0
  %439 = vmatpush1.msra.mxu0 %v160
  %440 = vmatprep.subr.mxu0 0.0
  %441 = vmatpush1.msra.mxu0 %v161
  %442 = vmatprep.subr.mxu0 0.0
  %443 = vmatpush1.msra.mxu0 %v162
  %444 = vmatprep.subr.mxu0 0.0
  %445 = vmatpush1.msra.mxu0 %v163
  %446 = vmatprep.subr.mxu0 0.0
  %447 = vmatpush1.msra.mxu0 %v164
  %448 = vmatprep.subr.mxu0 0.0
  %449 = vmatpush1.msra.mxu0 %v165
  %450 = vmatprep.subr.mxu0 0.0
  %451 = vmatpush1.msra.mxu0 %v166
  %452 = vmatprep.subr.mxu0 0.0
  %453 = vmatpush1.msra.mxu0 %v167
  %454 = vmatprep.subr.mxu0 0.0
  %455 = vmatpush1.msra.mxu0 %v168
  %456 = vmatprep.subr.mxu0 0.0
  %457 = vmatpush1.msra.mxu0 %v169
  %458 = vmatprep.subr.mxu0 0.0
  %459 = vmatpush1.msra.mxu0 %v170
  %460 = vmatprep.subr.mxu0 0.0
  %461 = vmatpush1.msra.mxu0 %v171
  %462 = vmatprep.subr.mxu0 0.0
  %463 = vmatpush1.msra.mxu0 %v172
  %464 = vmatprep.subr.mxu0 0.0
  %465 = vmatpush1.msra.mxu0 %v173
  %466 = vmatprep.subr.mxu0 0.0
  %467 = vmatpush1.msra.mxu0 %v174
  %468 = vmatprep.subr.mxu0 0.0
  %469 = vmatpush1.msra.mxu0 %v175
  %470 = vmatprep.subr.mxu0 0.0
  %471 = vmatpush1.msra.mxu0 %v176
  %472 = vmatprep.subr.mxu0 0.0
  %473 = vmatpush1.msra.mxu0 %v177
  %474 = vmatprep.mubr.f32.mxu0 %v41
  %475 = vmatmul.mubr.f32.gmra.mrb[0].mxu0 %v40
  %v476 = vpop.f32.mrb[0].mxu0
  %v477 = vadd.f32 %v402, %v476
  %v478 = vpop.f32.mrb[0].mxu0
  %479 = vmatprep.mubr.f32.mxu0 %v49
  %480 = vmatmul.mubr.f32.gmra.mrb[0].mxu0 %v48
  %v481 = vpop.f32.mrb[0].mxu0
  %v482 = vadd.f32 %v407, %v481
  %v483 = vpop.f32.mrb[0].mxu0
  %484 = vdwg.mxu0
  %v485 = vld [vmem:[%s3] sm:$0xff]
  %v486 = vld [vmem:[%s3 + $0x8] sm:$0xff]
  %v487 = vld [vmem:[%s3 + $0x10] sm:$0xff]
  %v488 = vld [vmem:[%s3 + $0x18] sm:$0xff]
  %v489 = vld [vmem:[%s4] sm:$0x1]
  %v491 = vlaneseq
  %v492 = vshrl.u32 %v491, 7
  %v493 = vsub.s32 0, %v492
  %v494 = vrot.slane %v489, %v493
  %vm496 = vcmask 261120
  %v498 = vsel %vm496, %v477, 0
  %v501 = vsel %vm496, %v482, 0
  %503 = vmatprep.subr.mxu0 0.0
  %504 = vmatpush1.msra.mxu0 %v485
  %505 = vmatprep.subr.mxu0 0.0
  %506 = vmatpush1.msra.mxu0 %v486
  %507 = vmatprep.subr.mxu0 0.0
  %508 = vmatpush1.msra.mxu0 %v487
  %509 = vmatprep.subr.mxu0 0.0
  %510 = vmatpush1.msra.mxu0 %v488
  %511 = vmatprep.subr.mxu0 0.0
  %512 = vmatpush1.msra.mxu0 0.0
  %513 = vmatprep.subr.mxu0 0.0
  %514 = vmatpush1.msra.mxu0 0.0
  %515 = vmatprep.subr.mxu0 0.0
  %516 = vmatpush1.msra.mxu0 0.0
  %517 = vmatprep.subr.mxu0 0.0
  %518 = vmatpush1.msra.mxu0 0.0
  %519 = vmatprep.subr.mxu0 0.0
  %520 = vmatpush1.msra.mxu0 0.0
  %521 = vmatprep.subr.mxu0 0.0
  %522 = vmatpush1.msra.mxu0 0.0
  %523 = vmatprep.subr.mxu0 0.0
  %524 = vmatpush1.msra.mxu0 0.0
  %525 = vmatprep.subr.mxu0 0.0
  %526 = vmatpush1.msra.mxu0 0.0
  %527 = vmatprep.subr.mxu0 0.0
  %528 = vmatpush1.msra.mxu0 0.0
  %529 = vmatprep.subr.mxu0 0.0
  %530 = vmatpush1.msra.mxu0 0.0
  %531 = vmatprep.subr.mxu0 0.0
  %532 = vmatpush1.msra.mxu0 0.0
  %533 = vmatprep.subr.mxu0 0.0
  %534 = vmatpush1.msra.mxu0 0.0
  %535 = vmatprep.subr.mxu0 0.0
  %536 = vmatpush1.msra.mxu0 0.0
  %537 = vmatprep.subr.mxu0 0.0
  %538 = vmatpush1.msra.mxu0 0.0
  %539 = vmatprep.subr.mxu0 0.0
  %540 = vmatpush1.msra.mxu0 0.0
  %541 = vmatprep.subr.mxu0 0.0
  %542 = vmatpush1.msra.mxu0 0.0
  %543 = vmatprep.subr.mxu0 0.0
  %544 = vmatpush1.msra.mxu0 0.0
  %545 = vmatprep.subr.mxu0 0.0
  %546 = vmatpush1.msra.mxu0 0.0
  %547 = vmatprep.subr.mxu0 0.0
  %548 = vmatpush1.msra.mxu0 0.0
  %549 = vmatprep.subr.mxu0 0.0
  %550 = vmatpush1.msra.mxu0 0.0
  %551 = vmatprep.subr.mxu0 0.0
  %552 = vmatpush1.msra.mxu0 0.0
  %553 = vmatprep.subr.mxu0 0.0
  %554 = vmatpush1.msra.mxu0 0.0
  %555 = vmatprep.subr.mxu0 0.0
  %556 = vmatpush1.msra.mxu0 0.0
  %557 = vmatprep.subr.mxu0 0.0
  %558 = vmatpush1.msra.mxu0 0.0
  %559 = vmatprep.subr.mxu0 0.0
  %560 = vmatpush1.msra.mxu0 0.0
  %561 = vmatprep.subr.mxu0 0.0
  %562 = vmatpush1.msra.mxu0 0.0
  %563 = vmatprep.subr.mxu0 0.0
  %564 = vmatpush1.msra.mxu0 0.0
  %565 = vmatprep.subr.mxu0 0.0
  %566 = vmatpush1.msra.mxu0 0.0
  %567 = vmatprep.mubr.f32.mxu0 0.0
  %568 = vmatmul.mubr.f32.gmra.mrb[0].mxu0 %v498
  %v569 = vpop.f32.mrb[0].mxu0
  %v570 = vadd.f32 %v494, %v569
  %v571 = vpop.f32.mrb[0].mxu0
  %572 = vmatprep.mubr.f32.mxu0 0.0
  %573 = vmatmul.mubr.f32.gmra.mrb[0].mxu0 %v501
  %v574 = vpop.f32.mrb[0].mxu0
  %v575 = vadd.f32 %v494, %v574
  %v576 = vpop.f32.mrb[0].mxu0
  %577 = vdwg.mxu0
  %v578 = vtanh.pop %v570
  %v579 = vtanh.pop %v575
  %v580 = vld [vmem:[%s5] sm:$0xff]
  %v581 = vld [vmem:[%s5 + $0x8] sm:$0xff]
  %v582 = vld [vmem:[%s5 + $0x10] sm:$0xff]
  %v583 = vld [vmem:[%s5 + $0x18] sm:$0xff]
  %v584 = vld [vmem:[%s5 + $0x20] sm:$0xff]
  %v585 = vld [vmem:[%s5 + $0x28] sm:$0xff]
  %v586 = vld [vmem:[%s5 + $0x30] sm:$0xff]
  %v587 = vld [vmem:[%s5 + $0x38] sm:$0xff]
  %v588 = vld [vmem:[#allocation2] sm:$0x1]
  %v590 = vlaneseq
  %v591 = vshrl.u32 %v590, 7
  %v592 = vsub.s32 0, %v591
  %v593 = vrot.slane %v588, %v592
  %vm595 = vcmask 523264
  %v597 = vsel %vm595, %v578, 0
  %v600 = vsel %vm595, %v579, 0
  %602 = vmatprep.subr.mxu0 0.0
  %603 = vmatpush1.msra.mxu0 %v580
  %604 = vmatprep.subr.mxu0 0.0
  %605 = vmatpush1.msra.mxu0 %v581
  %606 = vmatprep.subr.mxu0 0.0
  %607 = vmatpush1.msra.mxu0 %v582
  %608 = vmatprep.subr.mxu0 0.0
  %609 = vmatpush1.msra.mxu0 %v583
  %610 = vmatprep.subr.mxu0 0.0
  %611 = vmatpush1.msra.mxu0 %v584
  %612 = vmatprep.subr.mxu0 0.0
  %613 = vmatpush1.msra.mxu0 %v585
  %614 = vmatprep.subr.mxu0 0.0
  %615 = vmatpush1.msra.mxu0 %v586
  %616 = vmatprep.subr.mxu0 0.0
  %617 = vmatpush1.msra.mxu0 %v587
  %618 = vmatprep.subr.mxu0 0.0
  %619 = vmatpush1.msra.mxu0 0.0
  %620 = vmatprep.subr.mxu0 0.0
  %621 = vmatpush1.msra.mxu0 0.0
  %622 = vmatprep.subr.mxu0 0.0
  %623 = vmatpush1.msra.mxu0 0.0
  %624 = vmatprep.subr.mxu0 0.0
  %625 = vmatpush1.msra.mxu0 0.0
  %626 = vmatprep.subr.mxu0 0.0
  %627 = vmatpush1.msra.mxu0 0.0
  %628 = vmatprep.subr.mxu0 0.0
  %629 = vmatpush1.msra.mxu0 0.0
  %630 = vmatprep.subr.mxu0 0.0
  %631 = vmatpush1.msra.mxu0 0.0
  %632 = vmatprep.subr.mxu0 0.0
  %633 = vmatpush1.msra.mxu0 0.0
  %634 = vmatprep.subr.mxu0 0.0
  %635 = vmatpush1.msra.mxu0 0.0
  %636 = vmatprep.subr.mxu0 0.0
  %637 = vmatpush1.msra.mxu0 0.0
  %638 = vmatprep.subr.mxu0 0.0
  %639 = vmatpush1.msra.mxu0 0.0
  %640 = vmatprep.subr.mxu0 0.0
  %641 = vmatpush1.msra.mxu0 0.0
  %642 = vmatprep.subr.mxu0 0.0
  %643 = vmatpush1.msra.mxu0 0.0
  %644 = vmatprep.subr.mxu0 0.0
  %645 = vmatpush1.msra.mxu0 0.0
  %646 = vmatprep.subr.mxu0 0.0
  %647 = vmatpush1.msra.mxu0 0.0
  %648 = vmatprep.subr.mxu0 0.0
  %649 = vmatpush1.msra.mxu0 0.0
  %650 = vmatprep.subr.mxu0 0.0
  %651 = vmatpush1.msra.mxu0 0.0
  %652 = vmatprep.subr.mxu0 0.0
  %653 = vmatpush1.msra.mxu0 0.0
  %654 = vmatprep.subr.mxu0 0.0
  %655 = vmatpush1.msra.mxu0 0.0
  %656 = vmatprep.subr.mxu0 0.0
  %657 = vmatpush1.msra.mxu0 0.0
  %658 = vmatprep.subr.mxu0 0.0
  %659 = vmatpush1.msra.mxu0 0.0
  %660 = vmatprep.subr.mxu0 0.0
  %661 = vmatpush1.msra.mxu0 0.0
  %662 = vmatprep.subr.mxu0 0.0
  %663 = vmatpush1.msra.mxu0 0.0
  %664 = vmatprep.subr.mxu0 0.0
  %665 = vmatpush1.msra.mxu0 0.0
  %666 = vmatprep.mubr.f32.mxu0 0.0
  %667 = vmatmul.mubr.f32.gmra.mrb[0].mxu0 %v597
  %v668 = vpop.f32.mrb[0].mxu0
  %v669 = vadd.f32 %v593, %v668
  %v670 = vpop.f32.mrb[0].mxu0
  %671 = vmatprep.mubr.f32.mxu0 0.0
  %672 = vmatmul.mubr.f32.gmra.mrb[0].mxu0 %v600
  %v673 = vpop.f32.mrb[0].mxu0
  %v674 = vadd.f32 %v593, %v673
  %v675 = vpop.f32.mrb[0].mxu0
  %676 = vdwg.mxu0
  %vm677 = vcmask 7168
  %v678 = vsel %vm677, %v669, -inf
  %v679 = vrot.slane %v678, 4
  %v680 = vmax.f32 %v678, %v679
  %v681 = vrot.slane %v680, 2
  %v682 = vmax.f32 %v680, %v681
  %v683 = vrot.slane %v682, 1
  %v684 = vmax.f32 %v682, %v683
  %v685 = vsub.f32 %v669, %v684
  %v686 = vmul.f32 %v685, 1.442695
  %v687 = vpow.pop %v686
  %v688 = vsel %vm677, %v687, 0.0
  %v689 = vrot.slane %v688, 4
  %v690 = vadd.f32 %v688, %v689
  %v691 = vrot.slane %v690, 2
  %v692 = vadd.f32 %v690, %v691
  %v693 = vrot.slane %v692, 1
  %v694 = vadd.f32 %v692, %v693
  %v695 = vrcp.pop %v694
  %v696 = vmul.f32 %v687, %v695
  %698 = vset.pattern.permute.xlu0 0
  %699 = vperm.xlu0 %698, %v696
  %v700 = vpop.permute.xlu0 %699
  %v702 = vmul.f32 %v700, %v477
  %v703 = vsel %vm496, %v702, 0.0
  %v704 = vrot.slane %v703, 4
  %v705 = vadd.f32 %v703, %v704
  %v706 = vrot.slane %v705, 2
  %v707 = vadd.f32 %v705, %v706
  %v708 = vrot.slane %v707, 1
  %v709 = vadd.f32 %v707, %v708
  %v710 = vsel %vm677, %v674, -inf
  %v711 = vrot.slane %v710, 4
  %v712 = vmax.f32 %v710, %v711
  %v713 = vrot.slane %v712, 2
  %v714 = vmax.f32 %v712, %v713
  %v715 = vrot.slane %v714, 1
  %v716 = vmax.f32 %v714, %v715
  %v717 = vsub.f32 %v674, %v716
  %v718 = vmul.f32 %v717, 1.442695
  %v719 = vpow.pop %v718
  %v720 = vsel %vm677, %v719, 0.0
  %v721 = vrot.slane %v720, 4
  %v722 = vadd.f32 %v720, %v721
  %v723 = vrot.slane %v722, 2
  %v724 = vadd.f32 %v722, %v723
  %v725 = vrot.slane %v724, 1
  %v726 = vadd.f32 %v724, %v725
  %v727 = vrcp.pop %v726
  %v728 = vmul.f32 %v719, %v727
  %730 = vset.pattern.permute.xlu0 0
  %731 = vperm.xlu0 %730, %v728
  %v732 = vpop.permute.xlu0 %731
  %v734 = vmul.f32 %v732, %v482
  %v735 = vsel %vm496, %v734, 0.0
  %v736 = vrot.slane %v735, 4
  %v737 = vadd.f32 %v735, %v736
  %v738 = vrot.slane %v737, 2
  %v739 = vadd.f32 %v737, %v738
  %v740 = vrot.slane %v739, 1
  %v741 = vadd.f32 %v739, %v740
  %vm742 = vcmask 1040384
  %v743 = vsel %vm742, %v709, %v741
  %v744 = vld [vmem:[%s7] sm:$0xff]
  %v745 = vld [vmem:[%s7 + $0x8] sm:$0xff]
  %v746 = vld [vmem:[%s7 + $0x10] sm:$0xff]
  %v747 = vld [vmem:[%s7 + $0x18] sm:$0xff]
  %v748 = vld [vmem:[%s8] sm:$0x1]
  %v750 = vlaneseq
  %v751 = vshrl.u32 %v750, 7
  %v752 = vsub.s32 0, %v751
  %v753 = vrot.slane %v748, %v752
  %v756 = vsel %vm496, %v743, 0
  %758 = vmatprep.subr.mxu0 0.0
  %759 = vmatpush1.msra.mxu0 %v744
  %760 = vmatprep.subr.mxu0 0.0
  %761 = vmatpush1.msra.mxu0 %v745
  %762 = vmatprep.subr.mxu0 0.0
  %763 = vmatpush1.msra.mxu0 %v746
  %764 = vmatprep.subr.mxu0 0.0
  %765 = vmatpush1.msra.mxu0 %v747
  %766 = vmatprep.subr.mxu0 0.0
  %767 = vmatpush1.msra.mxu0 0.0
  %768 = vmatprep.subr.mxu0 0.0
  %769 = vmatpush1.msra.mxu0 0.0
  %770 = vmatprep.subr.mxu0 0.0
  %771 = vmatpush1.msra.mxu0 0.0
  %772 = vmatprep.subr.mxu0 0.0
  %773 = vmatpush1.msra.mxu0 0.0
  %774 = vmatprep.subr.mxu0 0.0
  %775 = vmatpush1.msra.mxu0 0.0
  %776 = vmatprep.subr.mxu0 0.0
  %777 = vmatpush1.msra.mxu0 0.0
  %778 = vmatprep.subr.mxu0 0.0
  %779 = vmatpush1.msra.mxu0 0.0
  %780 = vmatprep.subr.mxu0 0.0
  %781 = vmatpush1.msra.mxu0 0.0
  %782 = vmatprep.subr.mxu0 0.0
  %783 = vmatpush1.msra.mxu0 0.0
  %784 = vmatprep.subr.mxu0 0.0
  %785 = vmatpush1.msra.mxu0 0.0
  %786 = vmatprep.subr.mxu0 0.0
  %787 = vmatpush1.msra.mxu0 0.0
  %788 = vmatprep.subr.mxu0 0.0
  %789 = vmatpush1.msra.mxu0 0.0
  %790 = vmatprep.subr.mxu0 0.0
  %791 = vmatpush1.msra.mxu0 0.0
  %792 = vmatprep.subr.mxu0 0.0
  %793 = vmatpush1.msra.mxu0 0.0
  %794 = vmatprep.subr.mxu0 0.0
  %795 = vmatpush1.msra.mxu0 0.0
  %796 = vmatprep.subr.mxu0 0.0
  %797 = vmatpush1.msra.mxu0 0.0
  %798 = vmatprep.subr.mxu0 0.0
  %799 = vmatpush1.msra.mxu0 0.0
  %800 = vmatprep.subr.mxu0 0.0
  %801 = vmatpush1.msra.mxu0 0.0
  %802 = vmatprep.subr.mxu0 0.0
  %803 = vmatpush1.msra.mxu0 0.0
  %804 = vmatprep.subr.mxu0 0.0
  %805 = vmatpush1.msra.mxu0 0.0
  %806 = vmatprep.subr.mxu0 0.0
  %807 = vmatpush1.msra.mxu0 0.0
  %808 = vmatprep.subr.mxu0 0.0
  %809 = vmatpush1.msra.mxu0 0.0
  %810 = vmatprep.subr.mxu0 0.0
  %811 = vmatpush1.msra.mxu0 0.0
  %812 = vmatprep.subr.mxu0 0.0
  %813 = vmatpush1.msra.mxu0 0.0
  %814 = vmatprep.subr.mxu0 0.0
  %815 = vmatpush1.msra.mxu0 0.0
  %816 = vmatprep.subr.mxu0 0.0
  %817 = vmatpush1.msra.mxu0 0.0
  %818 = vmatprep.subr.mxu0 0.0
  %819 = vmatpush1.msra.mxu0 0.0
  %820 = vmatprep.subr.mxu0 0.0
  %821 = vmatpush1.msra.mxu0 0.0
  %822 = vmatprep.mubr.f32.mxu0 0.0
  %823 = vmatmul.mubr.f32.gmra.mrb[0].mxu0 %v756
  %v824 = vpop.f32.mrb[0].mxu0
  %v825 = vadd.f32 %v753, %v824
  %v826 = vpop.f32.mrb[0].mxu0
  %827 = vdwg.mxu0
  %828 = vst [vmem:[%s9] sm:$0x3] %v825
  // Predicated region
  $region38: #{simple_mil_forward.1} parent=0 // pred_check
    _
  $region39: #{simple_mil_forward.1} parent=0 // pred_check_branch
    %830 = sbr.rel (0) target = $region41
  $region40: #{simple_mil_forward.1} parent=0 // pred_region
    _
  $region41: #{simple_mil_forward.1} parent=0 // pred_fallthru
    _
  // Predicated region
  $region42: #{simple_mil_forward.1} parent=0 // pred_check
    _
  $region43: #{simple_mil_forward.1} parent=0 // pred_check_branch
    %832 = sbr.rel (0) target = $region45
  $region44: #{simple_mil_forward.1} parent=0 // pred_region
    _
  $region45: #{simple_mil_forward.1} parent=0 // pred_fallthru
    _

</llo_original>
